<compile_context>
chip_gen: v5e
topology: v5e:2x2
jax: 0.10.0
libtpu: 0.0.40
codegen_flags: <defaults>
</compile_context>

<pallas_src>
import functools

import numpy as np

import jax
import jax.numpy as jnp
from jax.experimental import pallas as pl
from jax.experimental.pallas import tpu as pltpu

LEAKY_SLOPE = 0.1  # slope of LeakyReLU in the synthetic sub-discriminator


# ------------------------------------------------------------ planning helpers
def _plan_spatial(hw, cap):
    """Lane-dense spatial tiling: tile size (multiple of 128) + #tiles + mask flag.

    No host-side padding: grid = cdiv(hw, t); the ragged last tile is masked
    inside the loss kernels (jnp.where); the forward path relies on Pallas's
    partial boundary-block writeback to drop out-of-bounds lanes.
    """
    hw_ceil = max(128, ((hw + 127) // 128) * 128)
    t_hw = min(cap, hw_ceil)
    n_j = int(pl.cdiv(hw, t_hw))
    mask_needed = (hw % t_hw) != 0
    return t_hw, n_j, mask_needed


def _valid_cols(t_hw, hw, j):
    col = jax.lax.broadcasted_iota(jnp.int32, (1, t_hw), 1) + j * t_hw
    return col < hw


# ----------------------------------------------------------------- MLP math --
def _single_mlp(x_ref, w1_ref, b1_ref, w2_ref, b2_ref, w3_ref, b3_ref):
    """x: (C, t) lane-dense tile. w1/w2 are bf16, transposed (h = W @ x).

    Returns h1 (H, t), h2 (H, t), s (1, t), all f32.
    """
    x = x_ref[...].astype(jnp.bfloat16)
    h1 = jnp.dot(w1_ref[...], x, preferred_element_type=jnp.float32) + b1_ref[...]
    h1 = jnp.where(h1 >= 0, h1, LEAKY_SLOPE * h1)
    h2 = jnp.dot(w2_ref[...], h1.astype(jnp.bfloat16),
                 preferred_element_type=jnp.float32) + b2_ref[...]
    h2 = jnp.where(h2 >= 0, h2, LEAKY_SLOPE * h2)
    # Layer 3 (hidden -> 1) as VPU mul + sublane reduce: avoids a degenerate
    # M=1 MXU pass and keeps the score lane-dense.
    s = jnp.sum(h2 * w3_ref[...], axis=0, keepdims=True) + b3_ref[...]
    return h1, h2, s


def _stacked_mlp(xr_ref, xs_ref, w1b_ref, b1b_ref, w2b_ref, b2b_ref,
                 w3_ref, b3_ref, hidden):
    """Evaluate the MLP on x and x_hat with ONE MXU pass per layer.

    The two (C, t) tiles are stacked along the contraction axis into a (2C, t)
    RHS; weights are block-diagonal (2H x 2C / 2H x 2H, bf16), so the padded
    MXU pass is shared between the real and fake branches.
    """
    xcat = jnp.concatenate([xr_ref[...], xs_ref[...]],
                           axis=0).astype(jnp.bfloat16)          # (2C, t)
    h1 = jnp.dot(w1b_ref[...], xcat,
                 preferred_element_type=jnp.float32) + b1b_ref[...]   # (2H, t)
    h1 = jnp.where(h1 >= 0, h1, LEAKY_SLOPE * h1)
    h2 = jnp.dot(w2b_ref[...], h1.astype(jnp.bfloat16),
                 preferred_element_type=jnp.float32) + b2b_ref[...]   # (2H, t)
    h2 = jnp.where(h2 >= 0, h2, LEAKY_SLOPE * h2)
    w3 = w3_ref[...]
    b3 = b3_ref[...]
    s_r = jnp.sum(h2[:hidden] * w3, axis=0, keepdims=True) + b3       # (1, t)
    s_s = jnp.sum(h2[hidden:] * w3, axis=0, keepdims=True) + b3       # (1, t)
    return s_r, s_s, h1, h2


# --------------------------------------------------- standalone forward kernels
def _fwd_scores_kernel(x_ref, w1_ref, b1_ref, w2_ref, b2_ref, w3_ref, b3_ref,
                       s_ref):
    _, _, s = _single_mlp(x_ref, w1_ref, b1_ref, w2_ref, b2_ref, w3_ref, b3_ref)
    s_ref[...] = s.astype(s_ref.dtype)


def _fwd_features_kernel(x_ref, w1_ref, b1_ref, w2_ref, b2_ref, w3_ref, b3_ref,
                         s_ref, h1_ref, h2_ref):
    h1, h2, s = _single_mlp(x_ref, w1_ref, b1_ref, w2_ref, b2_ref, w3_ref, b3_ref)
    s_ref[...] = s.astype(s_ref.dtype)
    h1_ref[...] = h1.astype(h1_ref.dtype)
    h2_ref[...] = h2.astype(h2_ref.dtype)


# ------------------------------------------------------ fused d_loss / g_loss
def _make_d_loss_kernel(obj_func, hw, t_hw, mask_needed, hidden):
    def kernel(xr_ref, xs_ref, w1b_ref, b1b_ref, w2b_ref, b2b_ref, w3_ref,
               b3_ref, lr_ref, ls_ref):
        j = pl.program_id(1)

        @pl.when(j == 0)
        def _():
            lr_ref[...] = jnp.zeros_like(lr_ref)
            ls_ref[...] = jnp.zeros_like(ls_ref)

        s_r, s_s, _, _ = _stacked_mlp(xr_ref, xs_ref, w1b_ref, b1b_ref,
                                      w2b_ref, b2b_ref, w3_ref, b3_ref, hidden)

        if obj_func == "hinge":
            er = jnp.maximum(1.0 - s_r, 0.0)   # mean(clamp(1 - ref, min=0))
            es = jnp.maximum(1.0 + s_s, 0.0)   # mean(clamp(1 + syn, min=0))
        else:  # "ls"
            er = (1.0 - s_r) ** 2              # mean((1 - ref)^2)
            es = s_s ** 2                      # mean(syn^2)

        if mask_needed:
            valid = _valid_cols(t_hw, hw, j)
            er = jnp.where(valid, er, 0.0)     # where-select: NaN-safe vs OOB lanes
            es = jnp.where(valid, es, 0.0)

        lr_ref[...] += jnp.sum(er, axis=1, keepdims=True)
        ls_ref[...] += jnp.sum(es, axis=1, keepdims=True)

    return kernel


def _make_g_loss_kernel(obj_func, hw, t_hw, mask_needed, hidden):
    def kernel(xr_ref, xs_ref, w1b_ref, b1b_ref, w2b_ref, b2b_ref, w3_ref,
               b3_ref, adv_ref, n1_ref, d1_ref, n2_ref, d2_ref):
        j = pl.program_id(1)

        @pl.when(j == 0)
        def _():
            adv_ref[...] = jnp.zeros_like(adv_ref)
            n1_ref[...] = jnp.zeros_like(n1_ref)
            d1_ref[...] = jnp.zeros_like(d1_ref)
            n2_ref[...] = jnp.zeros_like(n2_ref)
            d2_ref[...] = jnp.zeros_like(d2_ref)

        _, s_s, h1, h2 = _stacked_mlp(xr_ref, xs_ref, w1b_ref, b1b_ref,
                                      w2b_ref, b2b_ref, w3_ref, b3_ref, hidden)

        if obj_func == "hinge":
            ea = -s_s                          # mean(-syn)
        else:  # "ls"
            ea = (1.0 - s_s) ** 2              # mean((1 - syn)^2)

        # Feature matching: sublane-reduce first, then mask the (1, t) column
        # sums once (instead of masking the full (H, t) tiles).
        cn1 = jnp.sum(jnp.abs(h1[:hidden] - h1[hidden:]), axis=0, keepdims=True)
        cd1 = jnp.sum(jnp.abs(h1[:hidden]), axis=0, keepdims=True)
        cn2 = jnp.sum(jnp.abs(h2[:hidden] - h2[hidden:]), axis=0, keepdims=True)
        cd2 = jnp.sum(jnp.abs(h2[:hidden]), axis=0, keepdims=True)

        if mask_needed:
            valid = _valid_cols(t_hw, hw, j)
            ea = jnp.where(valid, ea, 0.0)
            cn1 = jnp.where(valid, cn1, 0.0)
            cd1 = jnp.where(valid, cd1, 0.0)
            cn2 = jnp.where(valid, cn2, 0.0)
            cd2 = jnp.where(valid, cd2, 0.0)

        adv_ref[...] += jnp.sum(ea, axis=1, keepdims=True)
        n1_ref[...] += jnp.sum(cn1, axis=1, keepdims=True)
        d1_ref[...] += jnp.sum(cd1, axis=1, keepdims=True)
        n2_ref[...] += jnp.sum(cn2, axis=1, keepdims=True)
        d2_ref[...] += jnp.sum(cd2, axis=1, keepdims=True)

    return kernel


# ------------------------------------------------------------ pallas_call glue
def _single_weight_specs(c, hidden):
    z = lambda b, j: (0, 0)
    return [
        pl.BlockSpec((hidden, c), z),            # w1 (transposed, bf16)
        pl.BlockSpec((hidden, 1), z),            # b1 (f32)
        pl.BlockSpec((hidden, hidden), z),       # w2 (transposed, bf16)
        pl.BlockSpec((hidden, 1), z),            # b2 (f32)
        pl.BlockSpec((hidden, 1), z),            # w3 column (f32)
        pl.BlockSpec((1, 1), z),                 # b3 (f32)
    ]


def _bd_weight_specs(c, hidden):
    z = lambda b, j: (0, 0)
    return [
        pl.BlockSpec((2 * hidden, 2 * c), z),        # blockdiag(w1, w1) bf16
        pl.BlockSpec((2 * hidden, 1), z),            # [b1; b1]
        pl.BlockSpec((2 * hidden, 2 * hidden), z),   # blockdiag(w2, w2) bf16
        pl.BlockSpec((2 * hidden, 1), z),            # [b2; b2]
        pl.BlockSpec((hidden, 1), z),                # w3
        pl.BlockSpec((1, 1), z),                     # b3
    ]


def _blockdiag_params(params):
    w1, b1, w2, b2, w3, b3 = params

    def bd(w):
        z = jnp.zeros_like(w)
        top = jnp.concatenate([w, z], axis=1)
        bot = jnp.concatenate([z, w], axis=1)
        return jnp.concatenate([top, bot], axis=0)

    return (bd(w1).astype(jnp.bfloat16),
            jnp.concatenate([b1, b1], axis=0),
            bd(w2).astype(jnp.bfloat16),
            jnp.concatenate([b2, b2], axis=0),
            w3, b3)


def _part_spec():
    return pl.BlockSpec((None, 1, 1), lambda b, j: (b, 0, 0))


@functools.partial(jax.jit, static_argnames=("return_features",))
def _forward_call(x3, params, return_features):
    B, C, HW = x3.shape
    hidden = params[0].shape[0]
    w1, b1, w2, b2, w3, b3 = params
    w1 = w1.astype(jnp.bfloat16)
    w2 = w2.astype(jnp.bfloat16)
    # Features path streams large HBM writes -> smaller tile; scores path can
    # use bigger lane-dense tiles.
    cap = 2048 if return_features else 8192
    t_hw, n_j, _ = _plan_spatial(HW, cap)
    grid = (B, n_j)
    out_dtype = x3.dtype

    x_spec = pl.BlockSpec((None, C, t_hw), lambda b, j: (b, 0, j))
    s_spec = pl.BlockSpec((None, 1, t_hw), lambda b, j: (b, 0, j))
    cp = pltpu.CompilerParams(dimension_semantics=("parallel", "parallel"))

    if return_features:
        f_spec = pl.BlockSpec((None, hidden, t_hw), lambda b, j: (b, 0, j))
        s, h1, h2 = pl.pallas_call(
            _fwd_features_kernel,
            out_shape=(jax.ShapeDtypeStruct((B, 1, HW), out_dtype),
                       jax.ShapeDtypeStruct((B, hidden, HW), out_dtype),
                       jax.ShapeDtypeStruct((B, hidden, HW), out_dtype)),
            grid=grid,
            in_specs=[x_spec] + _single_weight_specs(C, hidden),
            out_specs=(s_spec, f_spec, f_spec),
            compiler_params=cp,
        )(x3, w1, b1, w2, b2, w3, b3)
        return s, (h1, h2)

    s = pl.pallas_call(
        _fwd_scores_kernel,
        out_shape=jax.ShapeDtypeStruct((B, 1, HW), out_dtype),
        grid=grid,
        in_specs=[x_spec] + _single_weight_specs(C, hidden),
        out_specs=s_spec,
        compiler_params=cp,
    )(x3, w1, b1, w2, b2, w3, b3)
    return s, None


@functools.partial(jax.jit, static_argnames=("obj_func",))
def _d_loss_call(x3, xh3, params, obj_func):
    B, C, HW = x3.shape
    hidden = params[0].shape[0]
    bd_params = _blockdiag_params(params)
    t_hw, n_j, mask_needed = _plan_spatial(HW, 8192)

    kernel = _make_d_loss_kernel(obj_func, HW, t_hw, mask_needed, hidden)
    x_spec = pl.BlockSpec((None, C, t_hw), lambda b, j: (b, 0, j))
    part_shape = jax.ShapeDtypeStruct((B, 1, 1), jnp.float32)

    lr, ls = pl.pallas_call(
        kernel,
        out_shape=(part_shape, part_shape),
        grid=(B, n_j),
        in_specs=[x_spec, x_spec] + _bd_weight_specs(C, hidden),
        out_specs=(_part_spec(), _part_spec()),
        compiler_params=pltpu.CompilerParams(
            dimension_semantics=("parallel", "arbitrary")),
    )(x3, xh3, *bd_params)

    inv = 1.0 / float(B * HW)
    return jnp.sum(lr) * inv, jnp.sum(ls) * inv


@functools.partial(jax.jit, static_argnames=("obj_func",))
def _g_loss_call(x3, xh3, params, obj_func):
    B, C, HW = x3.shape
    hidden = params[0].shape[0]
    bd_params = _blockdiag_params(params)
    t_hw, n_j, mask_needed = _plan_spatial(HW, 8192)

    kernel = _make_g_loss_kernel(obj_func, HW, t_hw, mask_needed, hidden)
    x_spec = pl.BlockSpec((None, C, t_hw), lambda b, j: (b, 0, j))
    part_shape = jax.ShapeDtypeStruct((B, 1, 1), jnp.float32)

    adv_p, n1, d1, n2, d2 = pl.pallas_call(
        kernel,
        out_shape=(part_shape,) * 5,
        grid=(B, n_j),
        in_specs=[x_spec, x_spec] + _bd_weight_specs(C, hidden),
        out_specs=(_part_spec(),) * 5,
        compiler_params=pltpu.CompilerParams(
            dimension_semantics=("parallel", "arbitrary")),
    )(x3, xh3, *bd_params)

    inv = 1.0 / float(B * HW)
    loss_adv = jnp.sum(adv_p) * inv
    # mean(|ref-syn|)/mean(|ref|): identical counts cancel -> ratio of sums.
    loss_fm = 0.5 * (jnp.sum(n1) / jnp.sum(d1) + jnp.sum(n2) / jnp.sum(d2))
    return loss_adv, loss_fm


# ----------------------------------------------------------------- the module
class DiscCorePallas:
    """JAX/Pallas port of DiscCore with a minimal concrete sub-discriminator."""

    name = "pallas_disc"

    def __init__(self, in_ch=4, hidden=32, key=None):
        # TODO(synk): DiscCore.forward is abstract in the reference; this 1x1-conv
        # MLP scorer is a deterministic synthetic stand-in (no weight_norm).
        if key is None:
            key = jax.random.PRNGKey(0)
        k1, k2, k3 = jax.random.split(key, 3)
        scale = 0.1
        self.in_ch = in_ch
        self.hidden = hidden
        # Weights stored transposed: kernels compute h = W @ x with x laid out
        # (C, spatial) so the spatial axis sits on the 128-lane axis.
        self.w1 = (scale * jax.random.normal(k1, (hidden, in_ch))).astype(jnp.float32)
        self.b1 = jnp.zeros((hidden, 1), jnp.float32)
        self.w2 = (scale * jax.random.normal(k2, (hidden, hidden))).astype(jnp.float32)
        self.b2 = jnp.zeros((hidden, 1), jnp.float32)
        self.w3 = (scale * jax.random.normal(k3, (hidden, 1))).astype(jnp.float32)
        self.b3 = jnp.zeros((1, 1), jnp.float32)

    @property
    def params(self):
        return (self.w1, self.b1, self.w2, self.b2, self.w3, self.b3)

    # ---------------------------------------------------------------- forward
    def forward(self, x, return_features):
        B, C, H, W = x.shape                       # NCHW, like the PyTorch module
        assert C == self.in_ch
        x3 = x.reshape(B, C, H * W)                # keep caller dtype; no f32 copy
        s, feats = _forward_call(x3, self.params, return_features=return_features)
        scores = s.reshape(B, 1, H, W)
        if return_features:
            return scores, [f.reshape(B, self.hidden, H, W) for f in feats]
        return scores, None

    # ----------------------------------------------------------------- d_loss
    def d_loss(self, x, x_hat, obj_func="hinge"):
        if obj_func not in ("hinge", "ls"):
            raise ValueError(obj_func)
        B, C, H, W = x.shape
        x3 = x.reshape(B, C, H * W)
        xh3 = jax.lax.stop_gradient(x_hat).reshape(B, C, H * W)
        loss_ref, loss_syn = _d_loss_call(x3, xh3, self.params, obj_func=obj_func)
        # Device scalars in the report (no per-metric host sync in the hot path).
        report = {
            "d_adv_ref/" + self.name: loss_ref,
            "d_adv_syn/" + self.name: loss_syn,
            "nash_eq/" + self.name: loss_ref + loss_syn,
        }
        return loss_ref, loss_syn, report

    # ----------------------------------------------------------------- g_loss
    def g_loss(self, x, x_hat, obj_func="hinge"):
        if obj_func not in ("hinge", "ls"):
            raise ValueError(obj_func)
        B, C, H, W = x.shape
        x3 = x.reshape(B, C, H * W)
        xh3 = x_hat.reshape(B, C, H * W)
        loss_adv, loss_fm = _g_loss_call(x3, xh3, self.params, obj_func=obj_func)
        report = {
            "g_adv/" + self.name: loss_adv,
            "fm/" + self.name: loss_fm,
        }
        return loss_adv, loss_fm, report


# --------------------------------------------------------- pure-JAX reference
def _reference_forward(disc, xx):
    B, C, H, W = xx.shape
    xm = xx.reshape(B, C, H * W).astype(jnp.float32)
    h1 = jnp.einsum("hc,bcm->bhm", disc.w1, xm) + disc.b1[None]
    h1 = jnp.where(h1 >= 0, h1, LEAKY_SLOPE * h1)
    h2 = jnp.einsum("hk,bkm->bhm", disc.w2, h1) + disc.b2[None]
    h2 = jnp.where(h2 >= 0, h2, LEAKY_SLOPE * h2)
    s = jnp.sum(h2 * disc.w3[None], axis=1, keepdims=True) + disc.b3[None]
    return s, (h1, h2)


def _reference_losses(disc, x, x_hat, obj_func):
    s_r, f_r = _reference_forward(disc, x)
    s_s, f_s = _reference_forward(disc, x_hat)
    if obj_func == "hinge":
        lr = jnp.mean(jnp.maximum(1.0 - s_r, 0.0))
        ls = jnp.mean(jnp.maximum(1.0 + s_s, 0.0))
        ga = jnp.mean(-s_s)
    else:
        lr = jnp.mean((1.0 - s_r) ** 2)
        ls = jnp.mean(s_s ** 2)
        ga = jnp.mean((1.0 - s_s) ** 2)
    fm = 0.0
    for rf, sf in zip(f_r, f_s):
        fm = fm + jnp.mean(jnp.abs(rf - sf)) / jnp.mean(jnp.abs(rf))
    fm = fm / len(f_r)
    return lr, ls, ga, fm


if __name__ == "__main__":
    key = jax.random.PRNGKey(0)
    kx, kxh, kp = jax.random.split(key, 3)
    B, C, H, W = 2, 4, 16, 16
    x = jax.random.normal(kx, (B, C, H, W), jnp.float32)
    x_hat = jax.random.normal(kxh, (B, C, H, W), jnp.float32)

    disc = DiscCorePallas(in_ch=C, hidden=32, key=kp)

    # Standalone forward (both variants).
    scores, feats = disc.forward(x, True)
    scores_nf, _ = disc.forward(x, False)

    results = {}
    for obj in ("hinge", "ls"):
        lr, ls, _ = disc.d_loss(x, x_hat, obj_func=obj)
        ga, fm, _ = disc.g_loss(x, x_hat, obj_func=obj)
        results[obj] = (lr, ls, ga, fm)

    jax.block_until_ready((scores, scores_nf, results))

    # Correctness cross-check vs pure-f32 JAX reference (loose tol: kernels use
    # bf16 MXU operands with f32 accumulation).
    ref_s, (ref_h1, ref_h2) = _reference_forward(disc, x)
    np.testing.assert_allclose(np.asarray(scores_nf).reshape(B, 1, H * W),
                               np.asarray(ref_s), rtol=5e-2, atol=2e-2)
    np.testing.assert_allclose(np.asarray(scores).reshape(B, 1, H * W),
                               np.asarray(ref_s), rtol=5e-2, atol=2e-2)
    np.testing.assert_allclose(np.asarray(feats[1]).reshape(B, 32, H * W),
                               np.asarray(ref_h2), rtol=5e-2, atol=2e-2)

    for obj in ("hinge", "ls"):
        r_lr, r_ls, r_ga, r_fm = _reference_losses(disc, x, x_hat, obj)
        lr, ls, ga, fm = results[obj]
        np.testing.assert_allclose(np.asarray(lr), np.asarray(r_lr), rtol=2e-2, atol=2e-2)
        np.testing.assert_allclose(np.asarray(ls), np.asarray(r_ls), rtol=2e-2, atol=2e-2)
        np.testing.assert_allclose(np.asarray(ga), np.asarray(r_ga), rtol=2e-2, atol=2e-2)
        np.testing.assert_allclose(np.asarray(fm), np.asarray(r_fm), rtol=2e-2, atol=2e-2)

    print("KERNEL_OK")
</pallas_src>

<mosaic_0001>
module attributes {stable_mosaic.version = 11 : i64} {
  func.func @_fwd_features_kernel(%arg0: i32, %arg1: i32, %arg2: memref<1x4x256xf32, #tpu.memory_space<vmem>>, %arg3: memref<32x4xbf16, #tpu.memory_space<vmem>>, %arg4: memref<32x1xf32, #tpu.memory_space<vmem>>, %arg5: memref<32x32xbf16, #tpu.memory_space<vmem>>, %arg6: memref<32x1xf32, #tpu.memory_space<vmem>>, %arg7: memref<32x1xf32, #tpu.memory_space<vmem>>, %arg8: memref<1x1xf32, #tpu.memory_space<vmem>>, %arg9: memref<1x1x256xf32, #tpu.memory_space<vmem>>, %arg10: memref<1x32x256xf32, #tpu.memory_space<vmem>>, %arg11: memref<1x32x256xf32, #tpu.memory_space<vmem>>) attributes {dimension_semantics = [#tpu.dimension_semantics<parallel>, #tpu.dimension_semantics<parallel>], iteration_bounds = array<i64: 2, 1>, scalar_prefetch = 0 : i64, scratch_operands = 0 : i64, tpu.core_type = #tpu.core_type<tc>, window_params = [{transform_indices = @transform_0, window_bounds = array<i64: 1, 4, 256>}, {pipeline_mode = #tpu.pipeline_mode<synchronous>, transform_indices = @transform_1, window_bounds = array<i64: 32, 4>}, {pipeline_mode = #tpu.pipeline_mode<synchronous>, transform_indices = @transform_2, window_bounds = array<i64: 32, 1>}, {pipeline_mode = #tpu.pipeline_mode<synchronous>, transform_indices = @transform_3, window_bounds = array<i64: 32, 32>}, {pipeline_mode = #tpu.pipeline_mode<synchronous>, transform_indices = @transform_4, window_bounds = array<i64: 32, 1>}, {pipeline_mode = #tpu.pipeline_mode<synchronous>, transform_indices = @transform_5, window_bounds = array<i64: 32, 1>}, {pipeline_mode = #tpu.pipeline_mode<synchronous>, transform_indices = @transform_6, window_bounds = array<i64: 1, 1>}, {transform_indices = @transform_7, window_bounds = array<i64: 1, 1, 256>}, {transform_indices = @transform_8, window_bounds = array<i64: 1, 32, 256>}, {transform_indices = @transform_9, window_bounds = array<i64: 1, 32, 256>}]} {
    %c0 = arith.constant 0 : index
    %c0_0 = arith.constant 0 : index
    %c0_1 = arith.constant 0 : index
    %0 = vector.load %arg2[%c0, %c0_0, %c0_1] : memref<1x4x256xf32, #tpu.memory_space<vmem>>, vector<1x4x256xf32>
    %1 = vector.shape_cast %0 : vector<1x4x256xf32> to vector<4x256xf32>
    %2 = arith.truncf %1 : vector<4x256xf32> to vector<4x256xbf16>
    %c0_2 = arith.constant 0 : index
    %c0_3 = arith.constant 0 : index
    %3 = vector.load %arg3[%c0_2, %c0_3] : memref<32x4xbf16, #tpu.memory_space<vmem>>, vector<32x4xbf16>
    %cst = arith.constant dense<0.000000e+00> : vector<32x256xf32>
    %4 = tpu.matmul %3, %2, %cst {dimension_numbers = #tpu.dot_dimension_numbers<[1], [0], [0], [1], [0, 0, 1, 1], [], []>} : vector<32x4xbf16>, vector<4x256xbf16>, vector<32x256xf32> -> vector<32x256xf32>
    %c0_4 = arith.constant 0 : index
    %c0_5 = arith.constant 0 : index
    %5 = vector.load %arg4[%c0_4, %c0_5] : memref<32x1xf32, #tpu.memory_space<vmem>>, vector<32x1xf32>
    %6 = vector.broadcast %5 : vector<32x1xf32> to vector<32x256xf32>
    %7 = arith.addf %4, %6 : vector<32x256xf32>
    %cst_6 = arith.constant 0.000000e+00 : f32
    %8 = vector.broadcast %cst_6 : f32 to vector<32x256xf32>
    %9 = arith.cmpf oge, %7, %8 : vector<32x256xf32>
    %cst_7 = arith.constant 1.000000e-01 : f32
    %10 = vector.broadcast %cst_7 : f32 to vector<32x256xf32>
    %11 = arith.mulf %10, %7 : vector<32x256xf32>
    %12 = arith.select %9, %7, %11 : vector<32x256xi1>, vector<32x256xf32>
    %c0_8 = arith.constant 0 : index
    %c0_9 = arith.constant 0 : index
    %13 = vector.load %arg5[%c0_8, %c0_9] : memref<32x32xbf16, #tpu.memory_space<vmem>>, vector<32x32xbf16>
    %14 = arith.truncf %12 : vector<32x256xf32> to vector<32x256xbf16>
    %cst_10 = arith.constant dense<0.000000e+00> : vector<32x256xf32>
    %15 = tpu.matmul %13, %14, %cst_10 {dimension_numbers = #tpu.dot_dimension_numbers<[1], [0], [0], [1], [0, 0, 1, 1], [], []>} : vector<32x32xbf16>, vector<32x256xbf16>, vector<32x256xf32> -> vector<32x256xf32>
    %c0_11 = arith.constant 0 : index
    %c0_12 = arith.constant 0 : index
    %16 = vector.load %arg6[%c0_11, %c0_12] : memref<32x1xf32, #tpu.memory_space<vmem>>, vector<32x1xf32>
    %17 = vector.broadcast %16 : vector<32x1xf32> to vector<32x256xf32>
    %18 = arith.addf %15, %17 : vector<32x256xf32>
    %cst_13 = arith.constant 0.000000e+00 : f32
    %19 = vector.broadcast %cst_13 : f32 to vector<32x256xf32>
    %20 = arith.cmpf oge, %18, %19 : vector<32x256xf32>
    %cst_14 = arith.constant 1.000000e-01 : f32
    %21 = vector.broadcast %cst_14 : f32 to vector<32x256xf32>
    %22 = arith.mulf %21, %18 : vector<32x256xf32>
    %23 = arith.select %20, %18, %22 : vector<32x256xi1>, vector<32x256xf32>
    %c0_15 = arith.constant 0 : index
    %c0_16 = arith.constant 0 : index
    %24 = vector.load %arg7[%c0_15, %c0_16] : memref<32x1xf32, #tpu.memory_space<vmem>>, vector<32x1xf32>
    %25 = vector.broadcast %24 : vector<32x1xf32> to vector<32x256xf32>
    %26 = arith.mulf %23, %25 : vector<32x256xf32>
    %cst_17 = arith.constant dense<0.000000e+00> : vector<256xf32>
    %27 = vector.multi_reduction <add>, %26, %cst_17 [0] : vector<32x256xf32> to vector<256xf32>
    %28 = vector.shape_cast %27 : vector<256xf32> to vector<1x256xf32>
    %c0_18 = arith.constant 0 : index
    %c0_19 = arith.constant 0 : index
    %29 = vector.load %arg8[%c0_18, %c0_19] : memref<1x1xf32, #tpu.memory_space<vmem>>, vector<1x1xf32>
    %30 = vector.broadcast %29 : vector<1x1xf32> to vector<1x256xf32>
    %31 = arith.addf %28, %30 : vector<1x256xf32>
    %c0_20 = arith.constant 0 : index
    %c0_21 = arith.constant 0 : index
    %c0_22 = arith.constant 0 : index
    %32 = vector.load %arg9[%c0_20, %c0_21, %c0_22] : memref<1x1x256xf32, #tpu.memory_space<vmem>>, vector<1x1x256xf32>
    %33 = vector.shape_cast %32 : vector<1x1x256xf32> to vector<1x256xf32>
    %34 = vector.shape_cast %31 : vector<1x256xf32> to vector<1x1x256xf32>
    tpu.vector_store %arg9[%c0_20, %c0_21, %c0_22], %34 {strides = array<i32>} : memref<1x1x256xf32, #tpu.memory_space<vmem>>, vector<1x1x256xf32>,
    %c0_23 = arith.constant 0 : index
    %c0_24 = arith.constant 0 : index
    %c0_25 = arith.constant 0 : index
    %35 = vector.load %arg10[%c0_23, %c0_24, %c0_25] : memref<1x32x256xf32, #tpu.memory_space<vmem>>, vector<1x32x256xf32>
    %36 = vector.shape_cast %35 : vector<1x32x256xf32> to vector<32x256xf32>
    %37 = vector.shape_cast %12 : vector<32x256xf32> to vector<1x32x256xf32>
    tpu.vector_store %arg10[%c0_23, %c0_24, %c0_25], %37 {strides = array<i32>} : memref<1x32x256xf32, #tpu.memory_space<vmem>>, vector<1x32x256xf32>,
    %c0_26 = arith.constant 0 : index
    %c0_27 = arith.constant 0 : index
    %c0_28 = arith.constant 0 : index
    %38 = vector.load %arg11[%c0_26, %c0_27, %c0_28] : memref<1x32x256xf32, #tpu.memory_space<vmem>>, vector<1x32x256xf32>
    %39 = vector.shape_cast %38 : vector<1x32x256xf32> to vector<32x256xf32>
    %40 = vector.shape_cast %23 : vector<32x256xf32> to vector<1x32x256xf32>
    tpu.vector_store %arg11[%c0_26, %c0_27, %c0_28], %40 {strides = array<i32>} : memref<1x32x256xf32, #tpu.memory_space<vmem>>, vector<1x32x256xf32>,
    return
  }
  func.func @transform_0(%arg0: i32, %arg1: i32) -> (i32, i32, i32) {
    %c0_i32 = arith.constant 0 : i32
    %c0_i32_0 = arith.constant 0 : i32
    return %arg0, %c0_i32, %arg1 : i32, i32, i32
  }
  func.func @transform_1(%arg0: i32, %arg1: i32) -> (i32, i32) {
    %c0_i32 = arith.constant 0 : i32
    %c0_i32_0 = arith.constant 0 : i32
    %c0_i32_1 = arith.constant 0 : i32
    return %c0_i32, %c0_i32_0 : i32, i32
  }
  func.func @transform_2(%arg0: i32, %arg1: i32) -> (i32, i32) {
    %c0_i32 = arith.constant 0 : i32
    %c0_i32_0 = arith.constant 0 : i32
    %c0_i32_1 = arith.constant 0 : i32
    return %c0_i32, %c0_i32_0 : i32, i32
  }
  func.func @transform_3(%arg0: i32, %arg1: i32) -> (i32, i32) {
    %c0_i32 = arith.constant 0 : i32
    %c0_i32_0 = arith.constant 0 : i32
    %c0_i32_1 = arith.constant 0 : i32
    return %c0_i32, %c0_i32_0 : i32, i32
  }
  func.func @transform_4(%arg0: i32, %arg1: i32) -> (i32, i32) {
    %c0_i32 = arith.constant 0 : i32
    %c0_i32_0 = arith.constant 0 : i32
    %c0_i32_1 = arith.constant 0 : i32
    return %c0_i32, %c0_i32_0 : i32, i32
  }
  func.func @transform_5(%arg0: i32, %arg1: i32) -> (i32, i32) {
    %c0_i32 = arith.constant 0 : i32
    %c0_i32_0 = arith.constant 0 : i32
    %c0_i32_1 = arith.constant 0 : i32
    return %c0_i32, %c0_i32_0 : i32, i32
  }
  func.func @transform_6(%arg0: i32, %arg1: i32) -> (i32, i32) {
    %c0_i32 = arith.constant 0 : i32
    %c0_i32_0 = arith.constant 0 : i32
    %c0_i32_1 = arith.constant 0 : i32
    return %c0_i32, %c0_i32_0 : i32, i32
  }
  func.func @transform_7(%arg0: i32, %arg1: i32) -> (i32, i32, i32) {
    %c0_i32 = arith.constant 0 : i32
    %c0_i32_0 = arith.constant 0 : i32
    return %arg0, %c0_i32, %arg1 : i32, i32, i32
  }
  func.func @transform_8(%arg0: i32, %arg1: i32) -> (i32, i32, i32) {
    %c0_i32 = arith.constant 0 : i32
    %c0_i32_0 = arith.constant 0 : i32
    return %arg0, %c0_i32, %arg1 : i32, i32, i32
  }
  func.func @transform_9(%arg0: i32, %arg1: i32) -> (i32, i32, i32) {
    %c0_i32 = arith.constant 0 : i32
    %c0_i32_0 = arith.constant 0 : i32
    return %arg0, %c0_i32, %arg1 : i32, i32, i32
  }
}

</mosaic_0001>

<llo_original>
// kernel: _forward_call.1
$region0: #{_forward_call.1}
  #allocation0 [shape = 'u32[]', space=smem, size = 0x4, offset = 0x4, fixed_abs, tag = 'smem constant byte address 0x4 - core index']
  #allocation1 [shape = 'u32[72,128]{1,0:T(1,128)}', space=vmem, size = 0x9000, scoped, tag = 'internal scratch']
  #allocation2 [shape = 'f32[1,1]{1,0:T(1,128)S(1)}', space=vmem, size = 0x200, scoped, tag = 'scoped memory for _forward_call.1']
  %s0 = inlined_call_operand.vmem [shape: f32[2,4,256], index: 0, kind: input, shape index: {}]
  %s1 = inlined_call_operand.vmem [shape: bf16[32,4], index: 1, kind: input, shape index: {}]
  %s2 = inlined_call_operand.vmem [shape: f32[32,1], index: 2, kind: input, shape index: {}]
  %s3 = inlined_call_operand.vmem [shape: bf16[32,32], index: 3, kind: input, shape index: {}]
  %s4 = inlined_call_operand.vmem [shape: f32[32,1], index: 4, kind: input, shape index: {}]
  %s5 = inlined_call_operand.vmem [shape: f32[32,1], index: 5, kind: input, shape index: {}]
  %s6 = inlined_call_operand.<no memory space> [shape: f32[1,1], index: 6, kind: input, shape index: {}]
  %s7 = inlined_call_operand.hbm [shape: f32[2,1,256], index: 7, kind: output, shape index: {0}]
  %s8 = inlined_call_operand.hbm [shape: f32[2,32,256], index: 8, kind: output, shape index: {1}]
  %s9 = inlined_call_operand.hbm [shape: f32[2,32,256], index: 9, kind: output, shape index: {2}]
  %10 = xla_tuple %s7, %s8, %s9
  %s11 = sld [smem:[#allocation0]]
  $region77: #{_forward_call.1} parent=0
    _
  %s13 = ssub.s32 1, %s11
  %s14 = scalar_select 0, %s13, %s11
  %v15 = vstv %s6
  %16 = vst [vmem:[#allocation2] sm:$0x1] %v15
  $region1: #{_forward_call.1} parent=0
    #allocation3 [shape = 'u8[2048]{0}', space=vmem, size = 0x800, scoped, tag = 'output window, operand 0']
    #allocation4 [shape = 's32[2]{0}', space=sflag, size = 0x8, scoped, tag = 'scoped memory for _forward_call.1']
    #allocation5 [shape = 'u8[65536]{0}', space=vmem, size = 0x10000, scoped, tag = 'output window, operand 1']
    #allocation6 [shape = 's32[2]{0}', space=sflag, size = 0x8, scoped, tag = 'scoped memory for _forward_call.1']
    #allocation7 [shape = 'u8[65536]{0}', space=vmem, size = 0x10000, scoped, tag = 'output window, operand 2']
    %17 = vsyncpa [#allocation4], 0
    %s18 = scalar_lea.sflag [#allocation4], 1
    %19 = vsyncpa %s18, 0
    %20 = vsyncpa [#allocation6], 0
    %s21 = scalar_lea.sflag [#allocation6], 1
    %22 = vsyncpa %s21, 0
    loop: start=0, step=1, limit=4
    $region2: #{_forward_call.1} parent=1 // loop_pre_header
      _
    $region3: #{_forward_call.1} parent=1 // loop_header
      %s24 = sphi 0, %s28
      %p25 = scmp.ge.s32.totalorder %s24, 4
      %s31 = sphi 0, %s43
      %s32 = sphi 0, %s39
      %s33 = sphi 0, %s31
      %s34 = sphi 0, %s32
      %s35 = sphi 0, %s33
      %s36 = sphi 0, %s34
      %s48 = sphi 0, %s50
      %s51 = sphi 0, %s48
      %s52 = sphi 0, %s51
      %s68 = sphi 0, %s52
      %s72 = sphi 0, %s72
      %s74 = sphi 0, %s72
      %s75 = sphi 0, %s74
      %s89 = sphi 0, %s75
      %s93 = sphi 0, %s93
      %s95 = sphi 0, %s93
      %s96 = sphi 0, %s95
      %s110 = sphi 0, %s96
      %s114 = sphi 0, %s114
      %s116 = sphi 0, %s114
      %s117 = sphi 0, %s116
      %s131 = sphi 0, %s117
      %s135 = sphi 0, %s135
      %s137 = sphi 0, %s135
      %s138 = sphi 0, %s137
      %s152 = sphi 0, %s138
      %s156 = sphi 0, %s156
      %s158 = sphi 0, %s156
      %s159 = sphi 0, %s158
      %s173 = sphi 0, %s159
      %s177 = sphi 0, %s177
      %s179 = sphi 0, %s177
      %s180 = sphi 0, %s179
      %s194 = sphi 0, %s180
      %s202 = sphi 0, %s204
      %s205 = sphi 0, %s202
      %s206 = sphi 0, %s205
      %s222 = sphi 0, %s206
      %s230 = sphi 0, %s232
      %s233 = sphi 0, %s230
      %s234 = sphi 0, %s233
      %s250 = sphi 0, %s234
      %s258 = sphi 0, %s260
      %s261 = sphi 0, %s258
      %s262 = sphi 0, %s261
      %s278 = sphi 0, %s262
    $region4: #{_forward_call.1} parent=1 // loop_header_branch
      %27 = sbr.rel (%p25) target = $region8
    $region5: #{_forward_call.1} parent=1 // loop_body
      %s29 = ssub.s32 %s24, 1
      %s30 = ssub.s32 %s24, 2
      %s37 = sadd.s32 1, %s32
      %p38 = scmp.ge.s32.totalorder %s37, 1
      %s39 = scalar_select %p38, 0, %s37
      %s40 = sadd.s32 1, %s31
      %s41 = scalar_select %p38, %s40, %s31
      %p42 = scmp.ge.s32.totalorder %s41, 2
      %s43 = scalar_select %p42, 0, %s41
      %s44 = ssub.s32 %s31, %s43
      %s45 = ssub.s32 %s32, %s39
      %s46 = sor.u32 %s44, %s45
      %p47 = scmp.eq.s32.totalorder %s46, 0
      %s49 = sadd.s32 %s48, 1
      %s50 = scalar_select %p47, %s48, %s49
      %p53 = pneg %p47
      %p54 = scmp.eq.s32.totalorder %s24, 1
      %p55 = por %p53, %p54
      %p56 = scmp.ne.s32.totalorder %s48, %s51
      %p57 = scmp.eq.s32.totalorder %s24, 0
      %p58 = por %p56, %p57
      %p59 = scmp.ne.s32.totalorder %s48, %s51
      %p60 = scmp.eq.s32.totalorder %s29, 1
      %p61 = por %p59, %p60
      %p62 = scmp.ne.s32.totalorder %s51, %s52
      %p63 = scmp.eq.s32.totalorder %s29, 0
      %p64 = por %p62, %p63
      %p65 = scmp.ne.s32.totalorder %s51, %s52
      %p66 = scmp.eq.s32.totalorder %s30, 1
      %p67 = por %p65, %p66
      %p69 = scmp.ne.s32.totalorder %s52, %s68
      %p70 = scmp.eq.s32.totalorder %s30, 0
      %p71 = por %p69, %p70
      %s73 = sadd.s32 %s72, 1
      %p76 = scmp.eq.s32.totalorder %s24, 1
      %p77 = scmp.ne.s32.totalorder %s72, %s74
      %p78 = scmp.eq.s32.totalorder %s24, 0
      %p79 = por %p77, %p78
      %p80 = scmp.ne.s32.totalorder %s72, %s74
      %p81 = scmp.eq.s32.totalorder %s29, 1
      %p82 = por %p80, %p81
      %p83 = scmp.ne.s32.totalorder %s74, %s75
      %p84 = scmp.eq.s32.totalorder %s29, 0
      %p85 = por %p83, %p84
      %p86 = scmp.ne.s32.totalorder %s74, %s75
      %p87 = scmp.eq.s32.totalorder %s30, 1
      %p88 = por %p86, %p87
      %p90 = scmp.ne.s32.totalorder %s75, %s89
      %p91 = scmp.eq.s32.totalorder %s30, 0
      %p92 = por %p90, %p91
      %s94 = sadd.s32 %s93, 1
      %p97 = scmp.eq.s32.totalorder %s24, 1
      %p98 = scmp.ne.s32.totalorder %s93, %s95
      %p99 = scmp.eq.s32.totalorder %s24, 0
      %p100 = por %p98, %p99
      %p101 = scmp.ne.s32.totalorder %s93, %s95
      %p102 = scmp.eq.s32.totalorder %s29, 1
      %p103 = por %p101, %p102
      %p104 = scmp.ne.s32.totalorder %s95, %s96
      %p105 = scmp.eq.s32.totalorder %s29, 0
      %p106 = por %p104, %p105
      %p107 = scmp.ne.s32.totalorder %s95, %s96
      %p108 = scmp.eq.s32.totalorder %s30, 1
      %p109 = por %p107, %p108
      %p111 = scmp.ne.s32.totalorder %s96, %s110
      %p112 = scmp.eq.s32.totalorder %s30, 0
      %p113 = por %p111, %p112
      %s115 = sadd.s32 %s114, 1
      %p118 = scmp.eq.s32.totalorder %s24, 1
      %p119 = scmp.ne.s32.totalorder %s114, %s116
      %p120 = scmp.eq.s32.totalorder %s24, 0
      %p121 = por %p119, %p120
      %p122 = scmp.ne.s32.totalorder %s114, %s116
      %p123 = scmp.eq.s32.totalorder %s29, 1
      %p124 = por %p122, %p123
      %p125 = scmp.ne.s32.totalorder %s116, %s117
      %p126 = scmp.eq.s32.totalorder %s29, 0
      %p127 = por %p125, %p126
      %p128 = scmp.ne.s32.totalorder %s116, %s117
      %p129 = scmp.eq.s32.totalorder %s30, 1
      %p130 = por %p128, %p129
      %p132 = scmp.ne.s32.totalorder %s117, %s131
      %p133 = scmp.eq.s32.totalorder %s30, 0
      %p134 = por %p132, %p133
      %s136 = sadd.s32 %s135, 1
      %p139 = scmp.eq.s32.totalorder %s24, 1
      %p140 = scmp.ne.s32.totalorder %s135, %s137
      %p141 = scmp.eq.s32.totalorder %s24, 0
      %p142 = por %p140, %p141
      %p143 = scmp.ne.s32.totalorder %s135, %s137
      %p144 = scmp.eq.s32.totalorder %s29, 1
      %p145 = por %p143, %p144
      %p146 = scmp.ne.s32.totalorder %s137, %s138
      %p147 = scmp.eq.s32.totalorder %s29, 0
      %p148 = por %p146, %p147
      %p149 = scmp.ne.s32.totalorder %s137, %s138
      %p150 = scmp.eq.s32.totalorder %s30, 1
      %p151 = por %p149, %p150
      %p153 = scmp.ne.s32.totalorder %s138, %s152
      %p154 = scmp.eq.s32.totalorder %s30, 0
      %p155 = por %p153, %p154
      %s157 = sadd.s32 %s156, 1
      %p160 = scmp.eq.s32.totalorder %s24, 1
      %p161 = scmp.ne.s32.totalorder %s156, %s158
      %p162 = scmp.eq.s32.totalorder %s24, 0
      %p163 = por %p161, %p162
      %p164 = scmp.ne.s32.totalorder %s156, %s158
      %p165 = scmp.eq.s32.totalorder %s29, 1
      %p166 = por %p164, %p165
      %p167 = scmp.ne.s32.totalorder %s158, %s159
      %p168 = scmp.eq.s32.totalorder %s29, 0
      %p169 = por %p167, %p168
      %p170 = scmp.ne.s32.totalorder %s158, %s159
      %p171 = scmp.eq.s32.totalorder %s30, 1
      %p172 = por %p170, %p171
      %p174 = scmp.ne.s32.totalorder %s159, %s173
      %p175 = scmp.eq.s32.totalorder %s30, 0
      %p176 = por %p174, %p175
      %s178 = sadd.s32 %s177, 1
      %p181 = scmp.eq.s32.totalorder %s24, 1
      %p182 = scmp.ne.s32.totalorder %s177, %s179
      %p183 = scmp.eq.s32.totalorder %s24, 0
      %p184 = por %p182, %p183
      %p185 = scmp.ne.s32.totalorder %s177, %s179
      %p186 = scmp.eq.s32.totalorder %s29, 1
      %p187 = por %p185, %p186
      %p188 = scmp.ne.s32.totalorder %s179, %s180
      %p189 = scmp.eq.s32.totalorder %s29, 0
      %p190 = por %p188, %p189
      %p191 = scmp.ne.s32.totalorder %s179, %s180
      %p192 = scmp.eq.s32.totalorder %s30, 1
      %p193 = por %p191, %p192
      %p195 = scmp.ne.s32.totalorder %s180, %s194
      %p196 = scmp.eq.s32.totalorder %s30, 0
      %p197 = por %p195, %p196
      %s198 = ssub.s32 %s31, %s43
      %s199 = ssub.s32 %s32, %s39
      %s200 = sor.u32 %s198, %s199
      %p201 = scmp.eq.s32.totalorder %s200, 0
      %s203 = sadd.s32 %s202, 1
      %s204 = scalar_select %p201, %s202, %s203
      %p207 = pneg %p201
      %p208 = scmp.eq.s32.totalorder %s24, 1
      %p209 = por %p207, %p208
      %p210 = scmp.ne.s32.totalorder %s202, %s205
      %p211 = scmp.eq.s32.totalorder %s24, 0
      %p212 = por %p210, %p211
      %p213 = scmp.ne.s32.totalorder %s202, %s205
      %p214 = scmp.eq.s32.totalorder %s29, 1
      %p215 = por %p213, %p214
      %p216 = scmp.ne.s32.totalorder %s205, %s206
      %p217 = scmp.eq.s32.totalorder %s29, 0
      %p218 = por %p216, %p217
      %p219 = scmp.ne.s32.totalorder %s205, %s206
      %p220 = scmp.eq.s32.totalorder %s30, 1
      %p221 = por %p219, %p220
      %p223 = scmp.ne.s32.totalorder %s206, %s222
      %p224 = scmp.eq.s32.totalorder %s30, 0
      %p225 = por %p223, %p224
      %s226 = ssub.s32 %s31, %s43
      %s227 = ssub.s32 %s32, %s39
      %s228 = sor.u32 %s226, %s227
      %p229 = scmp.eq.s32.totalorder %s228, 0
      %s231 = sadd.s32 %s230, 1
      %s232 = scalar_select %p229, %s230, %s231
      %p235 = pneg %p229
      %p236 = scmp.eq.s32.totalorder %s24, 1
      %p237 = por %p235, %p236
      %p238 = scmp.ne.s32.totalorder %s230, %s233
      %p239 = scmp.eq.s32.totalorder %s24, 0
      %p240 = por %p238, %p239
      %p241 = scmp.ne.s32.totalorder %s230, %s233
      %p242 = scmp.eq.s32.totalorder %s29, 1
      %p243 = por %p241, %p242
      %p244 = scmp.ne.s32.totalorder %s233, %s234
      %p245 = scmp.eq.s32.totalorder %s29, 0
      %p246 = por %p244, %p245
      %p247 = scmp.ne.s32.totalorder %s233, %s234
      %p248 = scmp.eq.s32.totalorder %s30, 1
      %p249 = por %p247, %p248
      %p251 = scmp.ne.s32.totalorder %s234, %s250
      %p252 = scmp.eq.s32.totalorder %s30, 0
      %p253 = por %p251, %p252
      %s254 = ssub.s32 %s31, %s43
      %s255 = ssub.s32 %s32, %s39
      %s256 = sor.u32 %s254, %s255
      %p257 = scmp.eq.s32.totalorder %s256, 0
      %s259 = sadd.s32 %s258, 1
      %s260 = scalar_select %p257, %s258, %s259
      %p263 = pneg %p257
      %p264 = scmp.eq.s32.totalorder %s24, 1
      %p265 = por %p263, %p264
      %p266 = scmp.ne.s32.totalorder %s258, %s261
      %p267 = scmp.eq.s32.totalorder %s24, 0
      %p268 = por %p266, %p267
      %p269 = scmp.ne.s32.totalorder %s258, %s261
      %p270 = scmp.eq.s32.totalorder %s29, 1
      %p271 = por %p269, %p270
      %p272 = scmp.ne.s32.totalorder %s261, %s262
      %p273 = scmp.eq.s32.totalorder %s29, 0
      %p274 = por %p272, %p273
      %p275 = scmp.ne.s32.totalorder %s261, %s262
      %p276 = scmp.eq.s32.totalorder %s30, 1
      %p277 = por %p275, %p276
      %p279 = scmp.ne.s32.totalorder %s262, %s278
      %p280 = scmp.eq.s32.totalorder %s30, 0
      %p281 = por %p279, %p280
      %p282 = scmp.le.s32.totalorder 1, %s24
      %p283 = scmp.lt.s32.totalorder %s24, 3
      %p284 = pnand %p282, %p283
      %p285 = pneg %p284
      // Predicated region
      $region9: #{_forward_call.1} parent=5 // pred_check
        _
      $region10: #{_forward_call.1} parent=5 // pred_check_branch
        %287 = sbr.rel (%p284) target = $region12
      $region11: #{_forward_call.1} parent=5 // pred_region
        %s288 = ssub.s32 %s24, 1
        // Predicated region
        $region13: #{_forward_call.1} parent=11 // pred_check
          %p289 = pneg %p85
        $region14: #{_forward_call.1} parent=11 // pred_check_branch
          %291 = sbr.rel (%p289) target = $region16
        $region15: #{_forward_call.1} parent=11 // pred_region
          _
        $region16: #{_forward_call.1} parent=11 // pred_fallthru
          _
        // Predicated region
        $region17: #{_forward_call.1} parent=11 // pred_check
          %p292 = pneg %p106
        $region18: #{_forward_call.1} parent=11 // pred_check_branch
          %294 = sbr.rel (%p292) target = $region20
        $region19: #{_forward_call.1} parent=11 // pred_region
          _
        $region20: #{_forward_call.1} parent=11 // pred_fallthru
          _
        // Predicated region
        $region21: #{_forward_call.1} parent=11 // pred_check
          %p295 = pneg %p127
        $region22: #{_forward_call.1} parent=11 // pred_check_branch
          %297 = sbr.rel (%p295) target = $region24
        $region23: #{_forward_call.1} parent=11 // pred_region
          _
        $region24: #{_forward_call.1} parent=11 // pred_fallthru
          _
        // Predicated region
        $region25: #{_forward_call.1} parent=11 // pred_check
          %p298 = pneg %p148
        $region26: #{_forward_call.1} parent=11 // pred_check_branch
          %300 = sbr.rel (%p298) target = $region28
        $region27: #{_forward_call.1} parent=11 // pred_region
          _
        $region28: #{_forward_call.1} parent=11 // pred_fallthru
          _
        // Predicated region
        $region29: #{_forward_call.1} parent=11 // pred_check
          %p301 = pneg %p169
        $region30: #{_forward_call.1} parent=11 // pred_check_branch
          %303 = sbr.rel (%p301) target = $region32
        $region31: #{_forward_call.1} parent=11 // pred_region
          _
        $region32: #{_forward_call.1} parent=11 // pred_fallthru
          _
        // Predicated region
        $region33: #{_forward_call.1} parent=11 // pred_check
          %p304 = pneg %p190
        $region34: #{_forward_call.1} parent=11 // pred_check_branch
          %306 = sbr.rel (%p304) target = $region36
        $region35: #{_forward_call.1} parent=11 // pred_region
          _
        $region36: #{_forward_call.1} parent=11 // pred_fallthru
          _
      $region12: #{_forward_call.1} parent=5 // pred_fallthru
        _
      %p307 = scmp.lt.s32.totalorder %s24, 2
      // Predicated region
      $region37: #{_forward_call.1} parent=5 // pred_check
        %p308 = pneg %p307
      $region38: #{_forward_call.1} parent=5 // pred_check_branch
        %310 = sbr.rel (%p308) target = $region40
      $region39: #{_forward_call.1} parent=5 // pred_region
        // Predicated region
        $region41: #{_forward_call.1} parent=39 // pred_check
          %p311 = pneg %p58
        $region42: #{_forward_call.1} parent=39 // pred_check_branch
          %313 = sbr.rel (%p311) target = $region44
        $region43: #{_forward_call.1} parent=39 // pred_region
          %s314 = smul.u32 2, %s32
          %p315 = scmp.lt.s32.totalorder %s31, 1
          %s316 = scalar_select %p315, %s31, 1
          %p317 = scmp.lt.s32.totalorder %s314, 1
          %s318 = scalar_select %p317, %s314, 1
          %s319 = smul.addr %s316, 2
          %s320 = sadd.s32 %s318, %s319
          %s321 = smul.addr %s320, 4
          %s322 = scalar_lea.vmem %s0, %s321
          %s323 = smul.u32 2, %s32
        $region44: #{_forward_call.1} parent=39 // pred_fallthru
          _
      $region40: #{_forward_call.1} parent=5 // pred_fallthru
        _
      %p324 = scmp.le.s32.totalorder 1, %s24
      %p325 = scmp.lt.s32.totalorder %s24, 3
      %p326 = pnand %p324, %p325
      %p327 = pneg %p326
      // Predicated region
      $region45: #{_forward_call.1} parent=5 // pred_check
        _
      $region46: #{_forward_call.1} parent=5 // pred_check_branch
        %329 = sbr.rel (%p326) target = $region48
      $region47: #{_forward_call.1} parent=5 // pred_region
        %s330 = ssub.s32 %s24, 1
        %s331 = smul.u32 2, %s34
        %p332 = scmp.lt.s32.totalorder %s33, 1
        %s333 = scalar_select %p332, %s33, 1
        %p334 = scmp.lt.s32.totalorder %s331, 1
        %s335 = scalar_select %p334, %s331, 1
        %s336 = smul.addr %s333, 2
        %s337 = sadd.s32 %s335, %s336
        %s338 = smul.addr %s337, 4
        %s339 = scalar_lea.vmem %s0, %s338
        %p340 = pneg %p64
        %p341 = pneg %p61
        %p342 = pneg %p85
        %p343 = pneg %p82
        %p344 = pneg %p106
        %p345 = pneg %p103
        %p346 = pneg %p127
        %p347 = pneg %p124
        %p348 = pneg %p148
        %p349 = pneg %p145
        %p350 = pneg %p169
        %p351 = pneg %p166
        %p352 = pneg %p190
        %p353 = pneg %p187
        %p354 = pneg %p218
        %p355 = pneg %p215
        %s356 = sand.u32 %s205, 1
        %s357 = scalar_lea.sflag [#allocation4], %s356
        %s358 = sand.u32 %s205, 1
        %s359 = smul.addr %s358, 2
        %s360 = scalar_lea.vmem [#allocation3], %s359
        %p361 = pneg %p246
        %p362 = pneg %p243
        %s363 = sand.u32 %s29, 1
        %s364 = scalar_lea.sflag [#allocation6], %s363
        %s365 = sand.u32 %s233, 1
        %s366 = smul.addr %s365, 64
        %s367 = scalar_lea.vmem [#allocation5], %s366
        %p368 = pneg %p274
        %p369 = pneg %p271
        %s370 = sand.u32 %s29, 1
        %s371 = scalar_lea.sflag [#allocation6], %s370
        %s372 = sand.u32 %s261, 1
        %s373 = smul.addr %s372, 64
        %s374 = scalar_lea.vmem [#allocation7], %s373
        %s375 = smul.u32 2, %s34
        %p376 = scmp.lt.s32.totalorder %s33, 1
        %s377 = scalar_select %p376, %s33, 1
        %p378 = scmp.lt.s32.totalorder %s375, 1
        %s379 = scalar_select %p378, %s375, 1
        %s380 = smul.addr %s377, 2
        %s381 = sadd.s32 %s379, %s380
        %s382 = smul.addr %s381, 4
        %s383 = scalar_lea.vmem %s0, %s382
        %s384 = smul.u32 2, %s34
        %s385 = smul.u32 2, %s34
        %s386 = smul.u32 2, %s34
        %s387 = smul.u32 2, %s34
        %v389 = vld [vmem:[%s383] sm:$0xff]
        %391 = vst [vmem:[#allocation1] ss:$2 sm:$0xff] %v389
        %v392 = vld.sshfl [vmem:[#allocation1] sm:$0xff pattern:$0x75316420]
        %v393 = vld.sshfl [vmem:[#allocation1 + $0x8] sm:$0xff pattern:$0x75316420]
        %v396 = vpack.c.bf16 %v392, %v392
        %v397 = vpack.c.bf16 %v393, %v393
        %v398 = vld [vmem:[%s1] sm:$0xf]
        %v399 = vld [vmem:[%s1 + $0x4] sm:$0xf]
        %v400 = vld [vmem:[%s1 + $0x8] sm:$0xf]
        %v401 = vld [vmem:[%s1 + $0xc] sm:$0xf]
        %v402 = vld [vmem:[%s2] sm:$0xff]
        %v403 = vld [vmem:[%s2 + $0x8] sm:$0xff]
        %v404 = vld [vmem:[%s2 + $0x10] sm:$0xff]
        %v405 = vld [vmem:[%s2 + $0x18] sm:$0xff]
        %407 = vset.pattern.permute.xlu0 0
        %408 = vperm.xlu0 %407, %v402
        %v409 = vpop.permute.xlu0 %408
        %412 = vset.pattern.permute.xlu0 0
        %413 = vperm.xlu0 %412, %v403
        %v414 = vpop.permute.xlu0 %413
        %417 = vset.pattern.permute.xlu0 0
        %418 = vperm.xlu0 %417, %v404
        %v419 = vpop.permute.xlu0 %418
        %422 = vset.pattern.permute.xlu0 0
        %423 = vperm.xlu0 %422, %v405
        %v424 = vpop.permute.xlu0 %423
        %v430 = vunpack.c.l.b16 %v398
        %v431 = vunpack.c.l.b16 %v399
        %v432 = vunpack.c.l.b16 %v400
        %v433 = vunpack.c.l.b16 %v401
        %v434 = vpack.c.b16 %v431, %v430
        %v435 = vpack.c.b16 %v433, %v432
        %vm436 = vcmask 31744
        %v438 = vsel %vm436, %v434, 0
        %v441 = vsel %vm436, %v435, 0
        %vm443 = vcmask 1041408
        %v445 = vsel %vm443, %v396, 0
        %v448 = vsel %vm443, %v397, 0
        %450 = vmatpush.bf16.msra.mxu0 0
        %451 = vmatpush.bf16.msra.mxu0 0
        %452 = vmatpush.bf16.msra.mxu0 0
        %453 = vmatpush.bf16.msra.mxu0 0
        %454 = vmatpush.bf16.msra.mxu0 0
        %455 = vmatpush.bf16.msra.mxu0 0
        %456 = vmatpush.bf16.msra.mxu0 0
        %457 = vmatpush.bf16.msra.mxu0 %v445
        %458 = vmatmul.bf16.gmra.mxu0 %v438
        %v459 = vpop.f32.mrf.mxu0
        %v460 = vadd.f32 %v409, %v459
        %v461 = vpop.f32.mrf.mxu0
        %v462 = vadd.f32 %v414, %v461
        %463 = vmatmul.bf16.gmra.mxu0 %v441
        %v464 = vpop.f32.mrf.mxu0
        %v465 = vadd.f32 %v419, %v464
        %v466 = vpop.f32.mrf.mxu0
        %v467 = vadd.f32 %v424, %v466
        %468 = vdwg.mxu0
        %469 = vmatpush.bf16.msra.mxu0 0
        %470 = vmatpush.bf16.msra.mxu0 0
        %471 = vmatpush.bf16.msra.mxu0 0
        %472 = vmatpush.bf16.msra.mxu0 0
        %473 = vmatpush.bf16.msra.mxu0 0
        %474 = vmatpush.bf16.msra.mxu0 0
        %475 = vmatpush.bf16.msra.mxu0 0
        %476 = vmatpush.bf16.msra.mxu0 %v448
        %477 = vmatmul.bf16.gmra.mxu0 %v438
        %v478 = vpop.f32.mrf.mxu0
        %v479 = vadd.f32 %v409, %v478
        %v480 = vpop.f32.mrf.mxu0
        %v481 = vadd.f32 %v414, %v480
        %482 = vmatmul.bf16.gmra.mxu0 %v441
        %v483 = vpop.f32.mrf.mxu0
        %v484 = vadd.f32 %v419, %v483
        %v485 = vpop.f32.mrf.mxu0
        %v486 = vadd.f32 %v424, %v485
        %487 = vdwg.mxu0
        %vm488 = vcmp.ge.f32.partialorder %v460, 0.0
        %vm489 = vcmp.ge.f32.partialorder %v479, 0.0
        %vm490 = vcmp.ge.f32.partialorder %v462, 0.0
        %vm491 = vcmp.ge.f32.partialorder %v481, 0.0
        %vm492 = vcmp.ge.f32.partialorder %v465, 0.0
        %vm493 = vcmp.ge.f32.partialorder %v484, 0.0
        %vm494 = vcmp.ge.f32.partialorder %v467, 0.0
        %vm495 = vcmp.ge.f32.partialorder %v486, 0.0
        %v496 = vmul.f32 %v460, 0.1
        %v497 = vmul.f32 %v479, 0.1
        %v498 = vmul.f32 %v462, 0.1
        %v499 = vmul.f32 %v481, 0.1
        %v500 = vmul.f32 %v465, 0.1
        %v501 = vmul.f32 %v484, 0.1
        %v502 = vmul.f32 %v467, 0.1
        %v503 = vmul.f32 %v486, 0.1
        %v504 = vsel %vm488, %v460, %v496
        %v505 = vsel %vm489, %v479, %v497
        %v506 = vsel %vm490, %v462, %v498
        %v507 = vsel %vm491, %v481, %v499
        %v508 = vsel %vm492, %v465, %v500
        %v509 = vsel %vm493, %v484, %v501
        %v510 = vsel %vm494, %v467, %v502
        %v511 = vsel %vm495, %v486, %v503
        %v512 = vld [vmem:[%s3] sm:$0xf]
        %v513 = vld [vmem:[%s3 + $0x4] sm:$0xf]
        %v514 = vld [vmem:[%s3 + $0x8] sm:$0xf]
        %v515 = vld [vmem:[%s3 + $0xc] sm:$0xf]
        %v516 = vpack.c.bf16 %v506, %v504
        %v517 = vpack.c.bf16 %v507, %v505
        %v518 = vpack.c.bf16 %v510, %v508
        %v519 = vpack.c.bf16 %v511, %v509
        %v520 = vld [vmem:[%s4] sm:$0xff]
        %v521 = vld [vmem:[%s4 + $0x8] sm:$0xff]
        %v522 = vld [vmem:[%s4 + $0x10] sm:$0xff]
        %v523 = vld [vmem:[%s4 + $0x18] sm:$0xff]
        %525 = vset.pattern.permute.xlu0 0
        %526 = vperm.xlu0 %525, %v520
        %v527 = vpop.permute.xlu0 %526
        %530 = vset.pattern.permute.xlu0 0
        %531 = vperm.xlu0 %530, %v521
        %v532 = vpop.permute.xlu0 %531
        %535 = vset.pattern.permute.xlu0 0
        %536 = vperm.xlu0 %535, %v522
        %v537 = vpop.permute.xlu0 %536
        %540 = vset.pattern.permute.xlu0 0
        %541 = vperm.xlu0 %540, %v523
        %v542 = vpop.permute.xlu0 %541
        %v548 = vunpack.c.l.b16 %v512
        %v549 = vunpack.c.l.b16 %v513
        %v550 = vunpack.c.l.b16 %v514
        %v551 = vunpack.c.l.b16 %v515
        %v552 = vpack.c.b16 %v549, %v548
        %v553 = vpack.c.b16 %v551, %v550
        %vm554 = vcmask 261120
        %v556 = vsel %vm554, %v552, 0
        %v559 = vsel %vm554, %v553, 0
        %561 = vmatpush.bf16.msra.mxu0 0
        %562 = vmatpush.bf16.msra.mxu0 0
        %563 = vmatpush.bf16.msra.mxu0 0
        %564 = vmatpush.bf16.msra.mxu0 0
        %565 = vmatpush.bf16.msra.mxu0 0
        %566 = vmatpush.bf16.msra.mxu0 0
        %567 = vmatpush.bf16.msra.mxu0 %v518
        %568 = vmatpush.bf16.msra.mxu0 %v516
        %569 = vmatmul.bf16.gmra.mxu0 %v556
        %v570 = vpop.f32.mrf.mxu0
        %v571 = vadd.f32 %v527, %v570
        %v572 = vpop.f32.mrf.mxu0
        %v573 = vadd.f32 %v532, %v572
        %574 = vmatmul.bf16.gmra.mxu0 %v559
        %v575 = vpop.f32.mrf.mxu0
        %v576 = vadd.f32 %v537, %v575
        %v577 = vpop.f32.mrf.mxu0
        %v578 = vadd.f32 %v542, %v577
        %579 = vdwg.mxu0
        %580 = vmatpush.bf16.msra.mxu0 0
        %581 = vmatpush.bf16.msra.mxu0 0
        %582 = vmatpush.bf16.msra.mxu0 0
        %583 = vmatpush.bf16.msra.mxu0 0
        %584 = vmatpush.bf16.msra.mxu0 0
        %585 = vmatpush.bf16.msra.mxu0 0
        %586 = vmatpush.bf16.msra.mxu0 %v519
        %587 = vmatpush.bf16.msra.mxu0 %v517
        %588 = vmatmul.bf16.gmra.mxu0 %v556
        %v589 = vpop.f32.mrf.mxu0
        %v590 = vadd.f32 %v527, %v589
        %v591 = vpop.f32.mrf.mxu0
        %v592 = vadd.f32 %v532, %v591
        %593 = vmatmul.bf16.gmra.mxu0 %v559
        %v594 = vpop.f32.mrf.mxu0
        %v595 = vadd.f32 %v537, %v594
        %v596 = vpop.f32.mrf.mxu0
        %v597 = vadd.f32 %v542, %v596
        %598 = vdwg.mxu0
        %vm599 = vcmp.ge.f32.partialorder %v571, 0.0
        %vm600 = vcmp.ge.f32.partialorder %v590, 0.0
        %vm601 = vcmp.ge.f32.partialorder %v573, 0.0
        %vm602 = vcmp.ge.f32.partialorder %v592, 0.0
        %vm603 = vcmp.ge.f32.partialorder %v576, 0.0
        %vm604 = vcmp.ge.f32.partialorder %v595, 0.0
        %vm605 = vcmp.ge.f32.partialorder %v578, 0.0
        %vm606 = vcmp.ge.f32.partialorder %v597, 0.0
        %v607 = vmul.f32 %v571, 0.1
        %v608 = vmul.f32 %v590, 0.1
        %v609 = vmul.f32 %v573, 0.1
        %v610 = vmul.f32 %v592, 0.1
        %v611 = vmul.f32 %v576, 0.1
        %v612 = vmul.f32 %v595, 0.1
        %v613 = vmul.f32 %v578, 0.1
        %v614 = vmul.f32 %v597, 0.1
        %v615 = vsel %vm599, %v571, %v607
        %v616 = vsel %vm600, %v590, %v608
        %v617 = vsel %vm601, %v573, %v609
        %v618 = vsel %vm602, %v592, %v610
        %v619 = vsel %vm603, %v576, %v611
        %v620 = vsel %vm604, %v595, %v612
        %v621 = vsel %vm605, %v578, %v613
        %v622 = vsel %vm606, %v597, %v614
        %v623 = vld [vmem:[%s5] sm:$0xff]
        %v624 = vld [vmem:[%s5 + $0x8] sm:$0xff]
        %v625 = vld [vmem:[%s5 + $0x10] sm:$0xff]
        %v626 = vld [vmem:[%s5 + $0x18] sm:$0xff]
        %628 = vset.pattern.permute.xlu0 0
        %629 = vperm.xlu0 %628, %v623
        %v630 = vpop.permute.xlu0 %629
        %633 = vset.pattern.permute.xlu0 0
        %634 = vperm.xlu0 %633, %v624
        %v635 = vpop.permute.xlu0 %634
        %638 = vset.pattern.permute.xlu0 0
        %639 = vperm.xlu0 %638, %v625
        %v640 = vpop.permute.xlu0 %639
        %643 = vset.pattern.permute.xlu0 0
        %644 = vperm.xlu0 %643, %v626
        %v645 = vpop.permute.xlu0 %644
        %v647 = vmul.f32 %v615, %v630
        %v648 = vmul.f32 %v616, %v630
        %v649 = vmul.f32 %v617, %v635
        %v650 = vmul.f32 %v618, %v635
        %v651 = vmul.f32 %v619, %v640
        %v652 = vmul.f32 %v620, %v640
        %v653 = vmul.f32 %v621, %v645
        %v654 = vmul.f32 %v622, %v645
        %v655 = vadd.f32 %v647, %v649
        %v656 = vadd.f32 %v655, %v651
        %v657 = vadd.f32 %v656, %v653
        %v658 = vrot.slane %v657, 4
        %v659 = vadd.f32 %v657, %v658
        %v660 = vrot.slane %v659, 2
        %v661 = vadd.f32 %v659, %v660
        %v662 = vrot.slane %v661, 1
        %v663 = vadd.f32 %v661, %v662
        %v664 = vadd.f32 %v648, %v650
        %v665 = vadd.f32 %v664, %v652
        %v666 = vadd.f32 %v665, %v654
        %v667 = vrot.slane %v666, 4
        %v668 = vadd.f32 %v666, %v667
        %v669 = vrot.slane %v668, 2
        %v670 = vadd.f32 %v668, %v669
        %v671 = vrot.slane %v670, 1
        %v672 = vadd.f32 %v670, %v671
        %v673 = vld [vmem:[#allocation2] sm:$0x1]
        %675 = vset.pattern.permute.xlu0 0
        %676 = vperm.xlu0 %675, %v673
        %v677 = vpop.permute.xlu0 %676
        %v679 = vperm.slane %v677, 0
        %v680 = vadd.f32 %v663, %v679
        %v681 = vadd.f32 %v672, %v679
        %v684 = vrot.slane %v681, 7
        %vm685 = vcmask 1040384
        %v686 = vsel %vm685, %v680, %v684
        %v688 = vlaneseq
        %vm689 = vcmp.ge.s32.totalorder %v688, 0
        %vm690 = vcmp.lt.s32.totalorder %v688, 256
        %vm691 = vmand %vm689, %vm690
        %692 = vst.msk [vmem:[%s360] sm:$0x3] %vm691, %v686
        %693 = vst [vmem:[%s367] sm:$0xff] %v504
        %694 = vst [vmem:[%s367 + $0x8] sm:$0xff] %v505
        %695 = vst [vmem:[%s367 + $0x10] sm:$0xff] %v506
        %696 = vst [vmem:[%s367 + $0x18] sm:$0xff] %v507
        %697 = vst [vmem:[%s367 + $0x20] sm:$0xff] %v508
        %698 = vst [vmem:[%s367 + $0x28] sm:$0xff] %v509
        %699 = vst [vmem:[%s367 + $0x30] sm:$0xff] %v510
        %700 = vst [vmem:[%s367 + $0x38] sm:$0xff] %v511
        %701 = vst [vmem:[%s374] sm:$0xff] %v615
        %702 = vst [vmem:[%s374 + $0x8] sm:$0xff] %v616
        %703 = vst [vmem:[%s374 + $0x10] sm:$0xff] %v617
        %704 = vst [vmem:[%s374 + $0x18] sm:$0xff] %v618
        %705 = vst [vmem:[%s374 + $0x20] sm:$0xff] %v619
        %706 = vst [vmem:[%s374 + $0x28] sm:$0xff] %v620
        %707 = vst [vmem:[%s374 + $0x30] sm:$0xff] %v621
        %708 = vst [vmem:[%s374 + $0x38] sm:$0xff] %v622
        %s709 = sand.u32 %s205, 1
        %s710 = scalar_lea.sflag [#allocation4], %s709
        %s711 = sand.u32 %s205, 1
        %s712 = smul.addr %s711, 2
        %s713 = scalar_lea.vmem [#allocation3], %s712
        %s714 = sand.u32 %s29, 1
        %s715 = scalar_lea.sflag [#allocation6], %s714
        %s716 = sand.u32 %s233, 1
        %s717 = smul.addr %s716, 64
        %s718 = scalar_lea.vmem [#allocation5], %s717
        %s719 = sand.u32 %s29, 1
        %s720 = scalar_lea.sflag [#allocation6], %s719
        %s721 = sand.u32 %s261, 1
        %s722 = smul.addr %s721, 64
        %s723 = scalar_lea.vmem [#allocation7], %s722
        // Predicated region
        $region49: #{_forward_call.1} parent=47 // pred_check
          %p724 = pneg %p215
        $region50: #{_forward_call.1} parent=47 // pred_check_branch
          %726 = sbr.rel (%p724) target = $region52
        $region51: #{_forward_call.1} parent=47 // pred_region
          %s727 = smul.u32 2, %s34
          %729 = vsyncadd %s710, 0
          %s730 = smul.addr %s33, 2
          %s731 = sadd.s32 %s727, %s730
          %s732 = scalar_lea.hbm %s7, %s731
          %s734 = sshll.u32 %s713, 4
          %s735 = int_to_ptr.vmem [resolvable:$true] %s734
          %s736 = sshll.u32 %s732, 4
          %s737 = int_to_ptr.hbm [resolvable:$true] %s736
          %739 = dma.vmem_to_hbm [thread:$0]  %s735, 32, %s737, %s710
        $region52: #{_forward_call.1} parent=47 // pred_fallthru
          _
        // Predicated region
        $region53: #{_forward_call.1} parent=47 // pred_check
          %p740 = pneg %p243
        $region54: #{_forward_call.1} parent=47 // pred_check_branch
          %742 = sbr.rel (%p740) target = $region56
        $region55: #{_forward_call.1} parent=47 // pred_region
          %s743 = smul.u32 2, %s34
          %745 = vsyncadd %s715, 0
          %s746 = smul.addr %s33, 8
          %s747 = sadd.s32 %s743, %s746
          %s748 = smul.addr %s747, 8
          %s749 = scalar_lea.hbm %s8, %s748
          %s750 = sshll.u32 %s718, 4
          %s751 = int_to_ptr.vmem [resolvable:$true] %s750
          %s752 = sshll.u32 %s749, 4
          %s753 = int_to_ptr.hbm [resolvable:$true] %s752
          %758 = dma.vmem_to_hbm [thread:$0]  %s751, 1024, %s753, %s715, 256, 256, 16
        $region56: #{_forward_call.1} parent=47 // pred_fallthru
          _
        // Predicated region
        $region57: #{_forward_call.1} parent=47 // pred_check
          %p759 = pneg %p271
        $region58: #{_forward_call.1} parent=47 // pred_check_branch
          %761 = sbr.rel (%p759) target = $region60
        $region59: #{_forward_call.1} parent=47 // pred_region
          %s762 = smul.u32 2, %s34
          %764 = vsyncadd %s720, 0
          %s765 = smul.addr %s33, 8
          %s766 = sadd.s32 %s762, %s765
          %s767 = smul.addr %s766, 8
          %s768 = scalar_lea.hbm %s9, %s767
          %s769 = sshll.u32 %s723, 4
          %s770 = int_to_ptr.vmem [resolvable:$true] %s769
          %s771 = sshll.u32 %s768, 4
          %s772 = int_to_ptr.hbm [resolvable:$true] %s771
          %777 = dma.vmem_to_hbm [thread:$0]  %s770, 1024, %s772, %s720, 256, 256, 16
        $region60: #{_forward_call.1} parent=47 // pred_fallthru
          _
      $region48: #{_forward_call.1} parent=5 // pred_fallthru
        _
      %p778 = scmp.le.s32.totalorder 2, %s24
      // Predicated region
      $region61: #{_forward_call.1} parent=5 // pred_check
        %p779 = pneg %p778
      $region62: #{_forward_call.1} parent=5 // pred_check_branch
        %781 = sbr.rel (%p779) target = $region64
      $region63: #{_forward_call.1} parent=5 // pred_region
        %s782 = ssub.s32 %s24, 2
        // Predicated region
        $region65: #{_forward_call.1} parent=63 // pred_check
          %p783 = pneg %p221
        $region66: #{_forward_call.1} parent=63 // pred_check_branch
          %785 = sbr.rel (%p783) target = $region68
        $region67: #{_forward_call.1} parent=63 // pred_region
          %s786 = sand.u32 %s206, 1
          %s787 = scalar_lea.sflag [#allocation4], %s786
          %s788 = sand.u32 %s206, 1
          %s789 = smul.addr %s788, 2
          %s790 = scalar_lea.vmem [#allocation3], %s789
          %792 = dma.done %s787, 32
        $region68: #{_forward_call.1} parent=63 // pred_fallthru
          _
        // Predicated region
        $region69: #{_forward_call.1} parent=63 // pred_check
          %p793 = pneg %p249
        $region70: #{_forward_call.1} parent=63 // pred_check_branch
          %795 = sbr.rel (%p793) target = $region72
        $region71: #{_forward_call.1} parent=63 // pred_region
          %s796 = sand.u32 %s30, 1
          %s797 = scalar_lea.sflag [#allocation6], %s796
          %s798 = sand.u32 %s234, 1
          %s799 = smul.addr %s798, 64
          %s800 = scalar_lea.vmem [#allocation5], %s799
          %802 = dma.done %s797, 1024
        $region72: #{_forward_call.1} parent=63 // pred_fallthru
          _
        // Predicated region
        $region73: #{_forward_call.1} parent=63 // pred_check
          %p803 = pneg %p277
        $region74: #{_forward_call.1} parent=63 // pred_check_branch
          %805 = sbr.rel (%p803) target = $region76
        $region75: #{_forward_call.1} parent=63 // pred_region
          %s806 = sand.u32 %s30, 1
          %s807 = scalar_lea.sflag [#allocation6], %s806
          %s808 = sand.u32 %s262, 1
          %s809 = smul.addr %s808, 64
          %s810 = scalar_lea.vmem [#allocation7], %s809
          %812 = dma.done %s807, 1024
        $region76: #{_forward_call.1} parent=63 // pred_fallthru
          _
      $region64: #{_forward_call.1} parent=5 // pred_fallthru
        _
    $region6: #{_forward_call.1} parent=1 // loop_footer
      %s28 = sadd.s32 1, %s24
    $region7: #{_forward_call.1} parent=1 // loop_footer_branch
      %23 = sbr.rel target = $region3
    $region8: #{_forward_call.1} parent=1 // loop_exit
      _
    %813 = vsyncpa [#allocation4], 1
    %s814 = scalar_lea.sflag [#allocation4], 1
    %815 = vsyncpa %s814, 1
    %816 = vsyncpa [#allocation6], 1
    %s817 = scalar_lea.sflag [#allocation6], 1
    %818 = vsyncpa %s817, 1

</llo_original>
